<compile_context>
chip_gen: v7x
topology: tpu7x:2x2x1
jax: 0.10.0
libtpu: 0.0.40
codegen_flags: <defaults>
</compile_context>

<pallas_src>
import jax
import jax.numpy as jnp
from jax import lax
from jax.experimental import pallas as pl
from jax.experimental.pallas import tpu as pltpu

KERNEL = 3
STRIDE = 3                    # PyTorch MaxPool2d default: stride == kernel_size
WINDOW = KERNEL * KERNEL      # 9 non-overlapping window elements
MAX_LANE = 1024               # lane width of the flattened layout (multiple of 128)
# ceil_mode=False, padding=0, dilation=1  ->  out = (in - KERNEL) // STRIDE + 1


def _maxpool_window_kernel(x_ref, o_ref):
    # x_ref: (9, B, LANE)  -- window element k, row block, lane
    # o_ref: (B, LANE)
    acc = x_ref[0]
    for k in range(1, WINDOW):            # static unroll: 8 element-wise maxes (VPU only)
        acc = jnp.maximum(acc, x_ref[k])
    o_ref[...] = acc


def _pick_block_rows(n_rows, lane, itemsize, target_bytes=4 << 20):
    """Rows of the (n_rows, lane) layout per grid step.

    ~4 MiB input tiles (double-buffered in + out ~9 MiB: fits v5e's 16 MiB default
    scoped VMEM and amortizes the ~0.35 us/step overhead even at v7x HBM speed),
    sublane block rounded to the dtype multiple (8 f32 / 16 bf16 / 32 int8), and at
    least 2 grid steps whenever possible so v7x's two TensorCores both get work.
    """
    sub = max(8, 32 // max(1, itemsize))
    per_row = WINDOW * lane * itemsize
    b = max(1, target_bytes // per_row)
    b = max(sub, (b // sub) * sub)
    if n_rows >= 2 * sub:
        b = min(b, ((n_rows - 1) // sub) * sub)   # guarantees cdiv(n_rows, b) >= 2
    return int(min(b, n_rows))


@jax.jit
def maxpool2d(x):
    """x: (N, C, H, W) -> (N, C, H_out, W_out), semantics of MaxPool2d(3, ceil_mode=False)."""
    N, C, H, W = x.shape
    if H < KERNEL or W < KERNEL:
        raise ValueError(
            f"Input spatial dims ({H},{W}) must be >= kernel size {KERNEL} "
            "(matches PyTorch MaxPool2d behavior)."
        )
    H_out = (H - KERNEL) // STRIDE + 1
    W_out = (W - KERNEL) // STRIDE + 1
    P = N * C
    total = P * H_out * W_out            # flat NCHW output element count

    # ---- layout plumbing (one fused XLA copy): NCHW -> (9, P*H_out*W_out) plane-major ----
    xp = x.reshape(P, H, W)[:, : H_out * STRIDE, : W_out * STRIDE]   # ceil_mode=False crop
    xp = xp.reshape(P, H_out, KERNEL, W_out, KERNEL)
    xw = jnp.transpose(xp, (2, 4, 0, 1, 3)).reshape(WINDOW, total)   # (kh,kw, p,h,w)

    # ---- lane-dense re-blocking: pad flat dim to a multiple of LANE, view as (9, R, LANE) ----
    lane = min(MAX_LANE, pl.cdiv(total, 128) * 128)                  # multiple of 128
    n_rows = pl.cdiv(total, lane)
    pad = n_rows * lane - total
    if pad:
        xw = jnp.pad(xw, ((0, 0), (0, pad)))                         # padded lanes are discarded
    xw = xw.reshape(WINDOW, n_rows, lane)

    itemsize = jnp.dtype(x.dtype).itemsize
    B = _pick_block_rows(n_rows, lane, itemsize)
    grid = (pl.cdiv(n_rows, B),)

    out = pl.pallas_call(
        _maxpool_window_kernel,
        out_shape=jax.ShapeDtypeStruct((n_rows, lane), x.dtype),
        grid_spec=pltpu.PrefetchScalarGridSpec(
            num_scalar_prefetch=0,
            grid=grid,
            in_specs=[pl.BlockSpec((WINDOW, B, lane), lambda i: (0, i, 0))],
            out_specs=pl.BlockSpec((B, lane), lambda i: (i, 0)),
        ),
        compiler_params=pltpu.CompilerParams(
            dimension_semantics=("parallel",),
        ),
    )(xw)

    # ---- flat output is already NCHW order: zero-copy reshape back ----
    return out.reshape(n_rows * lane)[:total].reshape(N, C, H_out, W_out)


if __name__ == "__main__":
    key = jax.random.PRNGKey(0)
    # Small shapes consistent with the module's forward (any NCHW image works).
    x = jax.random.normal(key, (2, 4, 16, 16), dtype=jnp.float32)

    y = maxpool2d(x)
    jax.block_until_ready(y)

    # Reference: XLA reduce_window (same semantics as MaxPool2d(3, ceil_mode=False))
    y_ref = lax.reduce_window(
        x, -jnp.inf, lax.max,
        window_dimensions=(1, 1, KERNEL, KERNEL),
        window_strides=(1, 1, STRIDE, STRIDE),
        padding="VALID",
    )
    assert y.shape == (2, 4, 5, 5), y.shape
    assert jnp.allclose(y, y_ref), "mismatch vs reduce_window reference"

    print("KERNEL_OK")
</pallas_src>

<mosaic_0001>
module attributes {stable_mosaic.version = 11 : i64} {
  func.func @_maxpool_window_kernel(%arg0: i32, %arg1: memref<9x1x256xf32, #tpu.memory_space<vmem>>, %arg2: memref<1x256xf32, #tpu.memory_space<vmem>>) attributes {dimension_semantics = [#tpu.dimension_semantics<parallel>], iteration_bounds = array<i64: 1>, scalar_prefetch = 0 : i64, scratch_operands = 0 : i64, tpu.core_type = #tpu.core_type<tc>, window_params = [{transform_indices = @transform_0, window_bounds = array<i64: 9, 1, 256>}, {transform_indices = @transform_1, window_bounds = array<i64: 1, 256>}]} {
    %c0 = arith.constant 0 : index
    %c0_0 = arith.constant 0 : index
    %c0_1 = arith.constant 0 : index
    %0 = vector.load %arg1[%c0, %c0_0, %c0_1] : memref<9x1x256xf32, #tpu.memory_space<vmem>>, vector<1x1x256xf32>
    %1 = vector.shape_cast %0 : vector<1x1x256xf32> to vector<1x256xf32>
    %c1 = arith.constant 1 : index
    %c0_2 = arith.constant 0 : index
    %c0_3 = arith.constant 0 : index
    %2 = vector.load %arg1[%c1, %c0_2, %c0_3] : memref<9x1x256xf32, #tpu.memory_space<vmem>>, vector<1x1x256xf32>
    %3 = vector.shape_cast %2 : vector<1x1x256xf32> to vector<1x256xf32>
    %4 = arith.maximumf %1, %3 : vector<1x256xf32>
    %c2 = arith.constant 2 : index
    %c0_4 = arith.constant 0 : index
    %c0_5 = arith.constant 0 : index
    %5 = vector.load %arg1[%c2, %c0_4, %c0_5] : memref<9x1x256xf32, #tpu.memory_space<vmem>>, vector<1x1x256xf32>
    %6 = vector.shape_cast %5 : vector<1x1x256xf32> to vector<1x256xf32>
    %7 = arith.maximumf %4, %6 : vector<1x256xf32>
    %c3 = arith.constant 3 : index
    %c0_6 = arith.constant 0 : index
    %c0_7 = arith.constant 0 : index
    %8 = vector.load %arg1[%c3, %c0_6, %c0_7] : memref<9x1x256xf32, #tpu.memory_space<vmem>>, vector<1x1x256xf32>
    %9 = vector.shape_cast %8 : vector<1x1x256xf32> to vector<1x256xf32>
    %10 = arith.maximumf %7, %9 : vector<1x256xf32>
    %c4 = arith.constant 4 : index
    %c0_8 = arith.constant 0 : index
    %c0_9 = arith.constant 0 : index
    %11 = vector.load %arg1[%c4, %c0_8, %c0_9] : memref<9x1x256xf32, #tpu.memory_space<vmem>>, vector<1x1x256xf32>
    %12 = vector.shape_cast %11 : vector<1x1x256xf32> to vector<1x256xf32>
    %13 = arith.maximumf %10, %12 : vector<1x256xf32>
    %c5 = arith.constant 5 : index
    %c0_10 = arith.constant 0 : index
    %c0_11 = arith.constant 0 : index
    %14 = vector.load %arg1[%c5, %c0_10, %c0_11] : memref<9x1x256xf32, #tpu.memory_space<vmem>>, vector<1x1x256xf32>
    %15 = vector.shape_cast %14 : vector<1x1x256xf32> to vector<1x256xf32>
    %16 = arith.maximumf %13, %15 : vector<1x256xf32>
    %c6 = arith.constant 6 : index
    %c0_12 = arith.constant 0 : index
    %c0_13 = arith.constant 0 : index
    %17 = vector.load %arg1[%c6, %c0_12, %c0_13] : memref<9x1x256xf32, #tpu.memory_space<vmem>>, vector<1x1x256xf32>
    %18 = vector.shape_cast %17 : vector<1x1x256xf32> to vector<1x256xf32>
    %19 = arith.maximumf %16, %18 : vector<1x256xf32>
    %c7 = arith.constant 7 : index
    %c0_14 = arith.constant 0 : index
    %c0_15 = arith.constant 0 : index
    %20 = vector.load %arg1[%c7, %c0_14, %c0_15] : memref<9x1x256xf32, #tpu.memory_space<vmem>>, vector<1x1x256xf32>
    %21 = vector.shape_cast %20 : vector<1x1x256xf32> to vector<1x256xf32>
    %22 = arith.maximumf %19, %21 : vector<1x256xf32>
    %c8 = arith.constant 8 : index
    %c0_16 = arith.constant 0 : index
    %c0_17 = arith.constant 0 : index
    %23 = vector.load %arg1[%c8, %c0_16, %c0_17] : memref<9x1x256xf32, #tpu.memory_space<vmem>>, vector<1x1x256xf32>
    %24 = vector.shape_cast %23 : vector<1x1x256xf32> to vector<1x256xf32>
    %25 = arith.maximumf %22, %24 : vector<1x256xf32>
    %c0_18 = arith.constant 0 : index
    %c0_19 = arith.constant 0 : index
    %26 = vector.load %arg2[%c0_18, %c0_19] : memref<1x256xf32, #tpu.memory_space<vmem>>, vector<1x256xf32>
    tpu.vector_store %arg2[%c0_18, %c0_19], %25 {strides = array<i32>} : memref<1x256xf32, #tpu.memory_space<vmem>>, vector<1x256xf32>,
    return
  }
  func.func @transform_0(%arg0: i32) -> (i32, i32, i32) {
    %c0_i32 = arith.constant 0 : i32
    %c0_i32_0 = arith.constant 0 : i32
    %c0_i32_1 = arith.constant 0 : i32
    return %c0_i32, %arg0, %c0_i32_0 : i32, i32, i32
  }
  func.func @transform_1(%arg0: i32) -> (i32, i32) {
    %c0_i32 = arith.constant 0 : i32
    %c0_i32_0 = arith.constant 0 : i32
    return %arg0, %c0_i32 : i32, i32
  }
}

</mosaic_0001>

<llo_original>
// kernel: maxpool2d.1
$region0: #{maxpool2d.1}
  #allocation0 [shape = 'u32[]', space=smem, size = 0x4, offset = 0x4, fixed_abs, tag = 'smem constant byte address 0x4 - core index']
  #allocation1 [shape = 'u32[144,128]{1,0:T(1,128)}', space=vmem, size = 0x12000, scoped, tag = 'internal scratch']
  %s0 = inlined_call_operand.vmem [shape: f32[9,1,256], index: 0, kind: input, shape index: {}]
  %s1 = inlined_call_operand.vmem [shape: f32[1,256], index: 1, kind: output, shape index: {}]
  %s2 = sld [smem:[#allocation0]]
  $region14: #{maxpool2d.1} parent=0
    _
  %s4 = ssub.s32 1, %s2
  %s5 = scalar_select 0, %s4, %s2
  // Predicated region
  $region2: #{maxpool2d.1} parent=0 // pred_check
    _
  $region3: #{maxpool2d.1} parent=0 // pred_check_branch
    %7 = sbr.rel (0) target = $region5
  $region4: #{maxpool2d.1} parent=0 // pred_region
    _
  $region5: #{maxpool2d.1} parent=0 // pred_fallthru
    _
  %v8 = vld [vmem:[%s0] sm:$0x3]
  %s9 = scalar_lea.vmem %s0, 2
  %v10 = vld [vmem:[%s9] sm:$0x3]
  %v11 = vmax.f32 %v8, %v10
  %s12 = scalar_lea.vmem %s0, 4
  %v13 = vld [vmem:[%s12] sm:$0x3]
  %v14 = vmax.f32 %v11, %v13
  %s15 = scalar_lea.vmem %s0, 6
  %v16 = vld [vmem:[%s15] sm:$0x3]
  %v17 = vmax.f32 %v14, %v16
  %s18 = scalar_lea.vmem %s0, 8
  %v19 = vld [vmem:[%s18] sm:$0x3]
  %v20 = vmax.f32 %v17, %v19
  %s21 = scalar_lea.vmem %s0, 10
  %v22 = vld [vmem:[%s21] sm:$0x3]
  %v23 = vmax.f32 %v20, %v22
  %s24 = scalar_lea.vmem %s0, 12
  %v25 = vld [vmem:[%s24] sm:$0x3]
  %v26 = vmax.f32 %v23, %v25
  %s27 = scalar_lea.vmem %s0, 14
  %v28 = vld [vmem:[%s27] sm:$0x3]
  %v29 = vmax.f32 %v26, %v28
  %s30 = scalar_lea.vmem %s0, 16
  %v31 = vld [vmem:[%s30] sm:$0x3]
  %v32 = vmax.f32 %v29, %v31
  %v33 = vlaneseq
  %vm34 = vcmp.ge.s32.totalorder %v33, 0
  %vm35 = vcmp.lt.s32.totalorder %v33, 256
  %vm36 = vmand %vm34, %vm35
  %37 = vst.msk [vmem:[%s1] sm:$0x3] %vm36, %v32
  // Predicated region
  $region6: #{maxpool2d.1} parent=0 // pred_check
    _
  $region7: #{maxpool2d.1} parent=0 // pred_check_branch
    %39 = sbr.rel (0) target = $region9
  $region8: #{maxpool2d.1} parent=0 // pred_region
    _
  $region9: #{maxpool2d.1} parent=0 // pred_fallthru
    _
  // Predicated region
  $region10: #{maxpool2d.1} parent=0 // pred_check
    _
  $region11: #{maxpool2d.1} parent=0 // pred_check_branch
    %41 = sbr.rel (0) target = $region13
  $region12: #{maxpool2d.1} parent=0 // pred_region
    _
  $region13: #{maxpool2d.1} parent=0 // pred_fallthru
    _

</llo_original>
